<compile_context>
chip_gen: v7x
topology: tpu7x:2x2x1
jax: 0.10.0
libtpu: 0.0.40
codegen_flags: <defaults>
</compile_context>

<pallas_src>
import jax
import jax.numpy as jnp
from jax.experimental import pallas as pl
from jax.experimental.pallas import tpu as pltpu


# ---------------------------------------------------------------------------
# Chip-aware VMEM budgeting / tile planning
# ---------------------------------------------------------------------------

def _vmem_capacity_bytes():
    try:
        return int(pltpu.get_tpu_info().vmem_capacity_bytes)
    except Exception:
        return 64 * 1024 * 1024        # conservative fallback (v7x per-TC VMEM)


def _round8(n):
    return max(8, ((int(n) + 7) // 8) * 8)


def _block_vmem_bytes(tm, tk, o_cols, itemsize):
    """Per-grid-step VMEM footprint.  Pallas double-buffers every BlockSpec
    stream (including grid-invariant weight/bias) + the f32 acc scratch."""
    return (2 * tm * tk * itemsize                      # x tiles
            + 2 * tk * o_cols * itemsize                # weight tiles
            + 2 * tm * o_cols * itemsize                # output tiles
            + 2 * 8 * max(o_cols, 128) * itemsize       # bias tiles (generous)
            + tm * o_cols * 4)                          # f32 accumulator scratch


def _plan_tiles(B, D, o_cols, itemsize, budget):
    """Pick (tm, tk): batch tile and feature (reduction) tile."""
    b_cap = min(2048, _round8(B))

    # Preferred: no K tiling; largest batch tile that fits the budget.
    tm = b_cap
    while tm > 8 and _block_vmem_bytes(tm, D, o_cols, itemsize) > budget:
        tm = _round8(tm // 2)
    full_d_fits = _block_vmem_bytes(tm, D, o_cols, itemsize) <= budget
    if full_d_fits and (tm >= 256 or tm >= _round8(B)):
        return tm, D

    # K-tiling keeps the batch tile large when D is very big.  Only K blocks
    # that divide D exactly are used (a partial K block would reduce over
    # stale VMEM contents).
    if D % 128 == 0:
        m = D // 128
        for tm_c in (1024, 512, 256, 128, 64, 32, 16, 8):
            if tm_c > b_cap:
                continue
            for d in range(m, 0, -1):
                if m % d == 0 and _block_vmem_bytes(
                        tm_c, 128 * d, o_cols, itemsize) <= budget:
                    return tm_c, 128 * d

    # Fallback: smallest full-D tile (the wrapper raises vmem_limit_bytes to
    # cover it instead of silently exceeding the budget).
    return tm, D


# ---------------------------------------------------------------------------
# Kernels
# ---------------------------------------------------------------------------

def _linear_o1_kernel(x_ref, w_ref, b_ref, o_ref, acc_ref):
    # output_size == 1: VPU elementwise multiply + XLU lane-reduce.
    # x_ref: (tm, tk) VMEM, w_ref: (1, tk) VMEM (PyTorch layout),
    # b_ref: (1,) SMEM scalar, o_ref: (tm, 1) VMEM, acc_ref: (tm, 1) f32 VMEM.
    k = pl.program_id(1)

    @pl.when(k == 0)
    def _init():
        acc_ref[...] = jnp.zeros_like(acc_ref)

    x = x_ref[...].astype(jnp.float32)
    w = w_ref[...].astype(jnp.float32)                # (1, tk) broadcasts over rows
    acc_ref[...] += jnp.sum(x * w, axis=-1, keepdims=True)

    @pl.when(k == pl.num_programs(1) - 1)
    def _finalize():
        # Note: (tm, 1) store is lane-sparse but the whole output is only B*4
        # bytes; a lane-major transpose was measured as not worth it here.
        o_ref[...] = (acc_ref[...] + b_ref[0]).astype(o_ref.dtype)


def _linear_mxu_kernel(x_ref, wt_ref, b_ref, o_ref, acc_ref):
    # General output_size: MXU matmul against pre-transposed (tk, O) weight,
    # contracting (last, first) -> no per-grid-step relayout of the resident
    # weight tile.  f32 accumulation across the K grid axis.
    k = pl.program_id(1)

    @pl.when(k == 0)
    def _init():
        acc_ref[...] = jnp.zeros_like(acc_ref)

    acc_ref[...] += jnp.dot(x_ref[...], wt_ref[...],
                            preferred_element_type=jnp.float32)

    @pl.when(k == pl.num_programs(1) - 1)
    def _finalize():
        o_ref[...] = (acc_ref[...] + b_ref[...]).astype(o_ref.dtype)


# ---------------------------------------------------------------------------
# Wrapper
# ---------------------------------------------------------------------------

def linear_forward(x, w, b):
    """x: (B, D), w: (O, D) (PyTorch nn.Linear layout), b: (O,) -> (B, O)."""
    B, D = x.shape
    O = w.shape[0]
    itemsize = jnp.dtype(x.dtype).itemsize

    vmem_cap = _vmem_capacity_bytes()
    # Scoped VMEM limit: half of physical, capped at 64 MiB.
    vmem_limit = min(vmem_cap // 2, 64 * 1024 * 1024)
    budget = (vmem_limit * 3) // 4

    # Lane-dense output padding: only worth it when x traffic dominates.
    pad_out = (1 < O < 128) and (D >= 1024)
    o_cols = 128 if pad_out else O

    tm, tk = _plan_tiles(B, D, o_cols, itemsize, budget)

    # Guarantee >= 2 batch blocks so dual-TensorCore chips (v7x / megacore)
    # can split the "parallel" batch axis; single-block grids leave a core idle.
    if B >= 16 and tm >= B:
        tm = _round8(-(-B // 2))

    nb = pl.cdiv(B, tm)
    nk = pl.cdiv(D, tk)
    grid = (nb, nk)

    need = _block_vmem_bytes(tm, tk, o_cols, itemsize)
    if need > budget:   # extreme-D fallback: raise the limit to cover it
        vmem_limit = min(int(vmem_cap * 0.9), need + (8 * 1024 * 1024))

    compiler_params = pltpu.CompilerParams(
        dimension_semantics=("parallel", "arbitrary"),
        vmem_limit_bytes=int(vmem_limit),
    )

    if O == 1:
        # VPU reduce path; bias travels as an SMEM scalar (no VMEM stream).
        return pl.pallas_call(
            _linear_o1_kernel,
            out_shape=jax.ShapeDtypeStruct((B, 1), x.dtype),
            grid=grid,
            in_specs=[
                pl.BlockSpec((tm, tk), lambda i, k: (i, k)),        # x (pipelined)
                pl.BlockSpec((1, tk), lambda i, k: (0, k)),         # weight row
                pl.BlockSpec(memory_space=pltpu.MemorySpace.SMEM),  # bias scalar
            ],
            out_specs=pl.BlockSpec((tm, 1), lambda i, k: (i, 0)),
            scratch_shapes=[pltpu.VMEM((tm, 1), jnp.float32)],
            compiler_params=compiler_params,
        )(x, w, b)

    # General O: pre-transpose the weight ONCE to (D, O) (amortized / constant
    # folded under jit); pad to lane-dense O when profitable.
    wt = jnp.transpose(w)                                # (D, O)
    b2 = b.reshape(1, O)
    if pad_out:
        wt = jnp.pad(wt, ((0, 0), (0, o_cols - O)))
        b2 = jnp.pad(b2, ((0, 0), (0, o_cols - O)))

    y = pl.pallas_call(
        _linear_mxu_kernel,
        out_shape=jax.ShapeDtypeStruct((B, o_cols), x.dtype),
        grid=grid,
        in_specs=[
            pl.BlockSpec((tm, tk), lambda i, k: (i, k)),        # x (pipelined)
            pl.BlockSpec((tk, o_cols), lambda i, k: (k, 0)),    # weight
            pl.BlockSpec((1, o_cols), lambda i, k: (0, 0)),     # bias
        ],
        out_specs=pl.BlockSpec((tm, o_cols), lambda i, k: (i, 0)),
        scratch_shapes=[pltpu.VMEM((tm, o_cols), jnp.float32)],
        compiler_params=compiler_params,
    )(x, wt, b2)
    return y[:, :O] if pad_out else y


def init_linear_params(key, input_size, output_size=1, dtype=jnp.float32):
    """Deterministic init matching nn.Linear's default U(-1/sqrt(in), 1/sqrt(in))."""
    kw, kb = jax.random.split(key)
    bound = 1.0 / (input_size ** 0.5)
    w = jax.random.uniform(kw, (output_size, input_size), dtype, -bound, bound)
    b = jax.random.uniform(kb, (output_size,), dtype, -bound, bound)
    return w, b


if __name__ == "__main__":
    key = jax.random.PRNGKey(0)
    kx, kp = jax.random.split(key)

    # Module default config: output_size = 1  (VPU reduce path).
    batch, input_size, output_size = 8, 32, 1
    x = jax.random.normal(kx, (batch, input_size), jnp.float32)
    w, b = init_linear_params(kp, input_size, output_size)

    y = linear_forward(x, w, b)
    jax.block_until_ready(y)
    y_ref = x @ w.T + b[None, :]
    assert y.shape == (batch, output_size)
    assert jnp.allclose(y, y_ref, atol=1e-5, rtol=1e-5)

    # General-O MXU path at a small shape (un-padded output).
    w2, b2 = init_linear_params(jax.random.PRNGKey(1), input_size, 4)
    y2 = linear_forward(x, w2, b2)
    jax.block_until_ready(y2)
    assert jnp.allclose(y2, x @ w2.T + b2[None, :], atol=1e-5, rtol=1e-5)

    # Larger shape: exercises forced >=2 batch blocks and the lane-dense
    # (O padded to 128) output path.
    B3, D3, O3 = 128, 1024, 10
    x3 = jax.random.normal(jax.random.PRNGKey(2), (B3, D3), jnp.float32)
    w3, b3 = init_linear_params(jax.random.PRNGKey(3), D3, O3)
    y3 = linear_forward(x3, w3, b3)
    jax.block_until_ready(y3)
    y3_ref = x3 @ w3.T + b3[None, :]
    assert y3.shape == (B3, O3)
    assert jnp.allclose(y3, y3_ref, atol=2e-2, rtol=2e-2)

    print("KERNEL_OK")
</pallas_src>

<mosaic_0001>
module attributes {stable_mosaic.version = 11 : i64} {
  func.func @_linear_o1_kernel(%arg0: i32, %arg1: i32, %arg2: memref<8x32xf32, #tpu.memory_space<vmem>>, %arg3: memref<1x32xf32, #tpu.memory_space<vmem>>, %arg4: memref<1xf32, #tpu.memory_space<smem>>, %arg5: memref<8x1xf32, #tpu.memory_space<vmem>>, %arg6: memref<8x1xf32, #tpu.memory_space<vmem>>) attributes {dimension_semantics = [#tpu.dimension_semantics<parallel>, #tpu.dimension_semantics<arbitrary>], iteration_bounds = array<i64: 1, 1>, scalar_prefetch = 0 : i64, scratch_operands = 1 : i64, tpu.core_type = #tpu.core_type<tc>, window_params = [{transform_indices = @transform_0, window_bounds = array<i64: 8, 32>}, {transform_indices = @transform_1, window_bounds = array<i64: 1, 32>}, {transform_indices = @transform_2, window_bounds = array<i64: 1>}, {transform_indices = @transform_3, window_bounds = array<i64: 8, 1>}]} {
    %c0_i32 = arith.constant 0 : i32
    %0 = arith.cmpi eq, %arg1, %c0_i32 : i32
    %1 = arith.extui %0 : i1 to i32
    %c0_i32_0 = arith.constant 0 : i32
    %2 = arith.cmpi ne, %1, %c0_i32_0 : i32
    scf.if %2 {
      %cst_10 = arith.constant 0.000000e+00 : f32
      %15 = vector.broadcast %cst_10 : f32 to vector<8x1xf32>
      %c0_11 = arith.constant 0 : index
      %c0_12 = arith.constant 0 : index
      %16 = vector.load %arg6[%c0_11, %c0_12] : memref<8x1xf32, #tpu.memory_space<vmem>>, vector<8x1xf32>
      tpu.vector_store %arg6[%c0_11, %c0_12], %15 {strides = array<i32>} : memref<8x1xf32, #tpu.memory_space<vmem>>, vector<8x1xf32>,
    } else {
    }
    %c0 = arith.constant 0 : index
    %c0_1 = arith.constant 0 : index
    %3 = vector.load %arg2[%c0, %c0_1] : memref<8x32xf32, #tpu.memory_space<vmem>>, vector<8x32xf32>
    %c0_2 = arith.constant 0 : index
    %c0_3 = arith.constant 0 : index
    %4 = vector.load %arg3[%c0_2, %c0_3] : memref<1x32xf32, #tpu.memory_space<vmem>>, vector<1x32xf32>
    %c0_4 = arith.constant 0 : index
    %c0_5 = arith.constant 0 : index
    %5 = vector.load %arg6[%c0_4, %c0_5] : memref<8x1xf32, #tpu.memory_space<vmem>>, vector<8x1xf32>
    %6 = vector.broadcast %4 : vector<1x32xf32> to vector<8x32xf32>
    %7 = arith.mulf %3, %6 : vector<8x32xf32>
    %cst = arith.constant dense<0.000000e+00> : vector<8xf32>
    %8 = vector.multi_reduction <add>, %7, %cst [1] : vector<8x32xf32> to vector<8xf32>
    %9 = vector.shape_cast %8 : vector<8xf32> to vector<8x1xf32>
    %10 = arith.addf %5, %9 : vector<8x1xf32>
    %c0_6 = arith.constant 0 : index
    %c0_7 = arith.constant 0 : index
    %11 = vector.load %arg6[%c0_6, %c0_7] : memref<8x1xf32, #tpu.memory_space<vmem>>, vector<8x1xf32>
    tpu.vector_store %arg6[%c0_6, %c0_7], %10 {strides = array<i32>} : memref<8x1xf32, #tpu.memory_space<vmem>>, vector<8x1xf32>,
    %c0_i32_8 = arith.constant 0 : i32
    %12 = arith.cmpi eq, %arg1, %c0_i32_8 : i32
    %13 = arith.extui %12 : i1 to i32
    %c0_i32_9 = arith.constant 0 : i32
    %14 = arith.cmpi ne, %13, %c0_i32_9 : i32
    scf.if %14 {
      %c0_10 = arith.constant 0 : index
      %c0_11 = arith.constant 0 : index
      %15 = vector.load %arg6[%c0_10, %c0_11] : memref<8x1xf32, #tpu.memory_space<vmem>>, vector<8x1xf32>
      %c0_12 = arith.constant 0 : index
      %16 = memref.load %arg4[%c0_12] : memref<1xf32, #tpu.memory_space<smem>>
      %17 = vector.broadcast %16 : f32 to vector<8x1xf32>
      %18 = arith.addf %15, %17 : vector<8x1xf32>
      %c0_13 = arith.constant 0 : index
      %c0_14 = arith.constant 0 : index
      %19 = vector.load %arg5[%c0_13, %c0_14] : memref<8x1xf32, #tpu.memory_space<vmem>>, vector<8x1xf32>
      tpu.vector_store %arg5[%c0_13, %c0_14], %18 {strides = array<i32>} : memref<8x1xf32, #tpu.memory_space<vmem>>, vector<8x1xf32>,
    } else {
    }
    return
  }
  func.func @transform_0(%arg0: i32, %arg1: i32) -> (i32, i32) {
    %c0_i32 = arith.constant 0 : i32
    return %arg0, %arg1 : i32, i32
  }
  func.func @transform_1(%arg0: i32, %arg1: i32) -> (i32, i32) {
    %c0_i32 = arith.constant 0 : i32
    %c0_i32_0 = arith.constant 0 : i32
    return %c0_i32, %arg1 : i32, i32
  }
  func.func @transform_2(%arg0: i32, %arg1: i32) -> i32 {
    %c0_i32 = arith.constant 0 : i32
    %c0_i32_0 = arith.constant 0 : i32
    return %c0_i32 : i32
  }
  func.func @transform_3(%arg0: i32, %arg1: i32) -> (i32, i32) {
    %c0_i32 = arith.constant 0 : i32
    %c0_i32_0 = arith.constant 0 : i32
    return %arg0, %c0_i32 : i32, i32
  }
}

</mosaic_0001>

<llo_original>
// kernel: tpu_custom_call.1
$region0: #{tpu_custom_call.1}
  #allocation0 [shape = 'u32[]', space=smem, size = 0x4, offset = 0x4, fixed_abs, tag = 'smem constant byte address 0x4 - core index']
  #allocation1 [shape = 'u32[144,128]{1,0:T(1,128)}', space=vmem, size = 0x12000, scoped, tag = 'internal scratch']
  #allocation2 [shape = 'f32[8,1]{1,0:T(8,128)}', space=vmem, size = 0x1000, scoped, tag = 'scratch operand']
  #allocation3 [shape = 'f32[1]{0:T(128)S(6)}', space=smem, size = 0x200, scoped, tag = 'scoped memory for tpu_custom_call.1']
  %s0 = inlined_call_operand.hbm [shape: f32[8,32], index: 0, kind: input, shape index: {}]
  %s1 = inlined_call_operand.vmem [shape: f32[1,32], index: 1, kind: input, shape index: {}]
  %s2 = inlined_call_operand.<no memory space> [shape: f32[1], index: 2, kind: input, shape index: {}]
  %s3 = inlined_call_operand.vmem [shape: f32[8,1], index: 3, kind: output, shape index: {}]
  %s4 = sld [smem:[#allocation0]]
  $region34: #{tpu_custom_call.1} parent=0
    _
  %s6 = ssub.s32 1, %s4
  %s7 = scalar_select 0, %s6, %s4
  %8 = sst [smem:[#allocation3]] %s2
  $region1: #{tpu_custom_call.1} parent=0
    #allocation4 [shape = 'u8[4096]{0}', space=vmem, size = 0x1000, scoped, tag = 'input window, operand 0, single buffered']
    #allocation5 [shape = 's32[1]{0}', space=sflag, size = 0x4, scoped, tag = 'scoped memory for tpu_custom_call.1']
    %9 = vsyncpa [#allocation5], 0
    // Predicated region
    $region2: #{tpu_custom_call.1} parent=1 // pred_check
      _
    $region3: #{tpu_custom_call.1} parent=1 // pred_check_branch
      %11 = sbr.rel (0) target = $region5
    $region4: #{tpu_custom_call.1} parent=1 // pred_region
      %s13 = ssub.s32 128, 128
      %14 = vsyncadd [#allocation5], %s13
      %s16 = sshll.u32 [#allocation4], 4
      %s17 = int_to_ptr.vmem [resolvable:$true] %s16
      %19 = dma.hbm_to_vmem [thread:$0]  %s0, 128, %s17, [#allocation5]
    $region5: #{tpu_custom_call.1} parent=1 // pred_fallthru
      _
    // Predicated region
    $region6: #{tpu_custom_call.1} parent=1 // pred_check
      _
    $region7: #{tpu_custom_call.1} parent=1 // pred_check_branch
      %21 = sbr.rel (0) target = $region9
    $region8: #{tpu_custom_call.1} parent=1 // pred_region
      _
    $region9: #{tpu_custom_call.1} parent=1 // pred_fallthru
      _
    // Predicated region
    $region10: #{tpu_custom_call.1} parent=1 // pred_check
      _
    $region11: #{tpu_custom_call.1} parent=1 // pred_check_branch
      %23 = sbr.rel (0) target = $region13
    $region12: #{tpu_custom_call.1} parent=1 // pred_region
      _
    $region13: #{tpu_custom_call.1} parent=1 // pred_fallthru
      _
    // Predicated region
    $region14: #{tpu_custom_call.1} parent=1 // pred_check
      _
    $region15: #{tpu_custom_call.1} parent=1 // pred_check_branch
      %25 = sbr.rel (0) target = $region17
    $region16: #{tpu_custom_call.1} parent=1 // pred_region
      %26 = dma.done [#allocation5], 128
    $region17: #{tpu_custom_call.1} parent=1 // pred_fallthru
      _
    %p27 = scmp.eq.s32.totalorder 0, 0
    // Predicated region
    $region18: #{tpu_custom_call.1} parent=1 // pred_check
      %p28 = pneg %p27
    $region19: #{tpu_custom_call.1} parent=1 // pred_check_branch
      %30 = sbr.rel (%p28) target = $region21
    $region20: #{tpu_custom_call.1} parent=1 // pred_region
      %vm31 = vcmask 7168
      %32 = vst.msk [vmem:[#allocation2] sm:$0xff] %vm31, 0.0
    $region21: #{tpu_custom_call.1} parent=1 // pred_fallthru
      _
    %v33 = vld [vmem:[#allocation4] sm:$0xff]
    %v34 = vld [vmem:[%s1] sm:$0x1]
    %v35 = vld [vmem:[#allocation2] sm:$0xff]
    %v37 = vlaneseq
    %v38 = vshrl.u32 %v37, 7
    %v39 = vsub.s32 0, %v38
    %v40 = vrot.slane %v34, %v39
    %v42 = vmul.f32 %v33, %v40
    %vm43 = vcmask 261120
    %v44 = vsel %vm43, %v42, 0.0
    %45 = vadd.xlane.f32.xlu0 %v44
    %v46 = vpop.xlane.xlu0 %45
    %v47 = vadd.f32 %v35, %v46
    %vm48 = vcmask 7168
    %49 = vst.msk [vmem:[#allocation2] sm:$0xff] %vm48, %v47
    // Predicated region
    $region22: #{tpu_custom_call.1} parent=1 // pred_check
      %p50 = pneg %p27
    $region23: #{tpu_custom_call.1} parent=1 // pred_check_branch
      %52 = sbr.rel (%p50) target = $region25
    $region24: #{tpu_custom_call.1} parent=1 // pred_region
      %v53 = vld [vmem:[#allocation2] sm:$0xff]
      %s54 = sld [smem:[#allocation3]]
      %v55 = vstv %s54
      %v56 = vadd.f32 %v53, %v55
      %57 = vst.msk [vmem:[%s3] sm:$0xff] %vm48, %v56
    $region25: #{tpu_custom_call.1} parent=1 // pred_fallthru
      _
    // Predicated region
    $region26: #{tpu_custom_call.1} parent=1 // pred_check
      _
    $region27: #{tpu_custom_call.1} parent=1 // pred_check_branch
      %59 = sbr.rel (0) target = $region29
    $region28: #{tpu_custom_call.1} parent=1 // pred_region
      _
    $region29: #{tpu_custom_call.1} parent=1 // pred_fallthru
      _
    // Predicated region
    $region30: #{tpu_custom_call.1} parent=1 // pred_check
      _
    $region31: #{tpu_custom_call.1} parent=1 // pred_check_branch
      %61 = sbr.rel (0) target = $region33
    $region32: #{tpu_custom_call.1} parent=1 // pred_region
      _
    $region33: #{tpu_custom_call.1} parent=1 // pred_fallthru
      _
    %62 = vsyncpa [#allocation5], 1

</llo_original>
